<compile_context>
chip_gen: v7x
topology: tpu7x:2x2x1
jax: 0.10.0
libtpu: 0.0.40
codegen_flags: <defaults>
</compile_context>

<pallas_src>
import functools

import jax
import jax.numpy as jnp
from jax.experimental import pallas as pl
from jax.experimental.pallas import tpu as pltpu

GAMMA = 5  # matches FocalLoss(gamma=5)


def _focal_loss_kernel(logits_ref, targets_ref, alpha_t_ref, psum_ref, ce_ref,
                       *, n_total, gamma):
    tile_n, c = logits_ref.shape

    # Cast inside the kernel; wrapper passes native dtype to halve HBM traffic
    # when logits are bf16.  (f32 compute also required on v5e: no bf16 VPU.)
    logits = logits_ref[...].astype(jnp.float32)    # (T, C)
    tgt = targets_ref[...]                          # (T, 1) int32
    alpha_t = alpha_t_ref[...].astype(jnp.float32)  # (T, 1) alpha[targets]

    # One-hot gather of the target column (only remaining onehot reduction).
    col = jax.lax.broadcasted_iota(jnp.int32, (tile_n, c), 1)
    onehot = (col == tgt).astype(jnp.float32)       # (T, C)

    # cross_entropy(reduction='none'): logsumexp(logits) - logits[target]
    m = jnp.max(logits, axis=-1, keepdims=True)
    exp_shift = jnp.exp(logits - m)                 # the T*C EUP work
    sumexp = jnp.sum(exp_shift, axis=-1, keepdims=True)
    lse = m + jnp.log(sumexp)
    picked = jnp.sum(onehot * logits, axis=-1, keepdims=True)
    ce = lse - picked                               # (T, 1)

    # pt = softmax probability of the target class = exp(-ce).  Computing it
    # as exp(picked - lse) costs only T per-row EUP exps (noise next to the
    # T*C exp above) and removes a (T,C) multiply + row reduce + divide.
    pt = jnp.exp(picked - lse)                      # (T, 1)
    # gamma stays a Python int so (1-pt)**gamma lowers to integer_pow (VPU muls).
    focal = alpha_t * (1.0 - pt) ** gamma * ce      # (T, 1)

    # Ragged last tile: padded rows run on unspecified VMEM data (possibly
    # NaN/Inf), so mask with a select (jnp.where) -- never by multiplication.
    row = jax.lax.broadcasted_iota(jnp.int32, (tile_n, 1), 0)
    valid = (pl.program_id(0) * tile_n + row) < n_total
    ce = jnp.where(valid, ce, 0.0)
    focal = jnp.where(valid, focal, 0.0)

    ce_ref[...] = ce
    # Per-tile partial sum broadcast over a lane-aligned (1, 8, 128) block so
    # stores are unmasked and the grid axis needs no cross-tile accumulator.
    psum_ref[...] = jnp.broadcast_to(jnp.sum(focal), psum_ref.shape)


def _pick_tile_and_vmem(n, c, itemsize):
    """Byte-budgeted tile rows + scoped-VMEM limit, branched on chip VMEM."""
    try:
        vmem_cap = int(pltpu.get_tpu_info().vmem_capacity_bytes)
    except Exception:
        vmem_cap = 64 * 1024 * 1024  # conservative default: v7x-sized VMEM
    if vmem_cap >= 96 * 1024 * 1024:
        vmem_limit = 96 * 1024 * 1024   # v5e / v6e: 128 MiB physical VMEM
    else:
        vmem_limit = 48 * 1024 * 1024   # v7x: 64 MiB physical VMEM

    # Per-row VMEM footprint at a given tile size:
    #   logits block:      2 (double-buffer) * c * itemsize   (native dtype)
    #   f32 temporaries:   ~4 * c * 4  (logits_f32, iota, onehot, exp_shift)
    #   (T,1) blocks:      targets + alpha_t + ce out, each padded to 128
    #                      lanes in VMEM and double-buffered: 3 * 2 * 128 * 4
    per_row = 2 * c * itemsize + 16 * c + 3072
    budget = int(vmem_limit * 0.75)     # headroom for psum/semaphores/stack
    t = max(8, budget // per_row)
    t = min(t, n)
    if t < n:
        t = max(8, (t // 8) * 8)        # block sublane dim: multiple of 8
    return t, vmem_limit


def focal_loss(logits, targets, alpha, *, gamma=GAMMA, tile_n=None):
    """Returns (loss scalar, ce_loss per-sample) matching the PyTorch module."""
    n, c = logits.shape
    itemsize = jnp.dtype(logits.dtype).itemsize
    auto_tile, vmem_limit = _pick_tile_and_vmem(n, c, itemsize)
    if tile_n is None:
        tile_n = auto_tile
    else:
        tile_n = min(int(tile_n), n)
        if tile_n < n:
            tile_n = max(8, (tile_n // 8) * 8)
    num_tiles = pl.cdiv(n, tile_n)

    targets2d = targets.astype(jnp.int32).reshape(n, 1)
    # Gather alpha per-sample on the wrapper side: +4N bytes of HBM traffic,
    # removes a (T,C) multiply + per-row cross-lane reduction from the kernel.
    alpha_t = alpha.astype(jnp.float32)[targets].reshape(n, 1)

    kernel = functools.partial(_focal_loss_kernel, n_total=n, gamma=int(gamma))

    psum, ce = pl.pallas_call(
        kernel,
        grid=(num_tiles,),
        in_specs=[
            pl.BlockSpec((tile_n, c), lambda i: (i, 0)),   # logits tile (streamed, native dtype)
            pl.BlockSpec((tile_n, 1), lambda i: (i, 0)),   # targets tile
            pl.BlockSpec((tile_n, 1), lambda i: (i, 0)),   # per-sample alpha[targets]
        ],
        out_specs=(
            pl.BlockSpec((1, 8, 128), lambda i: (i, 0, 0)),  # per-tile partial focal sums
            pl.BlockSpec((tile_n, 1), lambda i: (i, 0)),     # per-sample ce
        ),
        out_shape=(
            jax.ShapeDtypeStruct((num_tiles, 8, 128), jnp.float32),
            jax.ShapeDtypeStruct((n, 1), jnp.float32),
        ),
        compiler_params=pltpu.CompilerParams(
            dimension_semantics=("parallel",),   # lets v7x shard tiles across both TCs
            vmem_limit_bytes=vmem_limit,
        ),
        cost_estimate=pl.CostEstimate(
            flops=8 * n * c,
            transcendentals=n * c + 2 * n,
            bytes_accessed=n * c * itemsize + 12 * n + num_tiles * 8 * 128 * 4,
        ),
    )(logits, targets2d, alpha_t)

    loss = jnp.sum(psum[:, 0, 0]) / n
    return loss, ce[:, 0]


if __name__ == "__main__":
    key = jax.random.PRNGKey(0)
    k1, k2 = jax.random.split(key)

    N, C = 40, 32          # small demo shapes
    TILE_N = 16            # 3 grid steps; last tile is ragged -> exercises masking
    logits = jax.random.normal(k1, (N, C), dtype=jnp.float32)
    targets = jax.random.randint(k2, (N,), 0, C, dtype=jnp.int32)
    alpha = jnp.linspace(0.5, 1.5, C, dtype=jnp.float32)

    loss, ce_loss = focal_loss(logits, targets, alpha, gamma=GAMMA, tile_n=TILE_N)
    jax.block_until_ready((loss, ce_loss))

    # pure-JAX reference
    logp = jax.nn.log_softmax(logits, axis=-1)
    ce_ref = -jnp.take_along_axis(logp, targets[:, None], axis=-1)[:, 0]
    pt_ref = jnp.exp(-ce_ref)
    loss_ref = jnp.mean(alpha[targets] * (1.0 - pt_ref) ** GAMMA * ce_ref)
    assert ce_loss.shape == (N,)
    assert jnp.allclose(ce_loss, ce_ref, atol=1e-5), "ce mismatch"
    assert jnp.allclose(loss, loss_ref, atol=1e-5), "loss mismatch"

    # also exercise the auto tile-size path
    loss2, ce2 = focal_loss(logits, targets, alpha, gamma=GAMMA)
    jax.block_until_ready((loss2, ce2))
    assert jnp.allclose(ce2, ce_ref, atol=1e-5), "ce mismatch (auto tile)"
    assert jnp.allclose(loss2, loss_ref, atol=1e-5), "loss mismatch (auto tile)"

    print("KERNEL_OK")
</pallas_src>

<mosaic_0001>
module attributes {stable_mosaic.version = 11 : i64} {
  func.func @_focal_loss_kernel(%arg0: i32, %arg1: memref<16x32xf32, #tpu.memory_space<vmem>>, %arg2: memref<16x1xi32, #tpu.memory_space<vmem>>, %arg3: memref<16x1xf32, #tpu.memory_space<vmem>>, %arg4: memref<1x8x128xf32, #tpu.memory_space<vmem>>, %arg5: memref<16x1xf32, #tpu.memory_space<vmem>>) attributes {dimension_semantics = [#tpu.dimension_semantics<parallel>], iteration_bounds = array<i64: 3>, scalar_prefetch = 0 : i64, scratch_operands = 0 : i64, tpu.core_type = #tpu.core_type<tc>, window_params = [{transform_indices = @transform_0, window_bounds = array<i64: 16, 32>}, {transform_indices = @transform_1, window_bounds = array<i64: 16, 1>}, {transform_indices = @transform_2, window_bounds = array<i64: 16, 1>}, {transform_indices = @transform_3, window_bounds = array<i64: 1, 8, 128>}, {transform_indices = @transform_4, window_bounds = array<i64: 16, 1>}]} {
    %c0 = arith.constant 0 : index
    %c0_0 = arith.constant 0 : index
    %0 = vector.load %arg1[%c0, %c0_0] : memref<16x32xf32, #tpu.memory_space<vmem>>, vector<16x32xf32>
    %c0_1 = arith.constant 0 : index
    %c0_2 = arith.constant 0 : index
    %1 = vector.load %arg2[%c0_1, %c0_2] : memref<16x1xi32, #tpu.memory_space<vmem>>, vector<16x1xi32>
    %c0_3 = arith.constant 0 : index
    %c0_4 = arith.constant 0 : index
    %2 = vector.load %arg3[%c0_3, %c0_4] : memref<16x1xf32, #tpu.memory_space<vmem>>, vector<16x1xf32>
    %3 = tpu.iota {dimensions = array<i32: 1>} : vector<16x32xi32>
    %4 = vector.broadcast %1 : vector<16x1xi32> to vector<16x32xi32>
    %5 = arith.cmpi eq, %3, %4 : vector<16x32xi32>
    %6 = arith.extui %5 : vector<16x32xi1> to vector<16x32xi32>
    %7 = arith.sitofp %6 : vector<16x32xi32> to vector<16x32xf32>
    %cst = arith.constant dense<0xFF800000> : vector<16xf32>
    %8 = vector.multi_reduction <maximumf>, %0, %cst [1] : vector<16x32xf32> to vector<16xf32>
    %9 = vector.shape_cast %8 : vector<16xf32> to vector<16x1xf32>
    %10 = vector.broadcast %9 : vector<16x1xf32> to vector<16x32xf32>
    %11 = arith.subf %0, %10 : vector<16x32xf32>
    %12 = math.exp %11 : vector<16x32xf32>
    %cst_5 = arith.constant dense<0.000000e+00> : vector<16xf32>
    %13 = vector.multi_reduction <add>, %12, %cst_5 [1] : vector<16x32xf32> to vector<16xf32>
    %14 = vector.shape_cast %13 : vector<16xf32> to vector<16x1xf32>
    %15 = math.log %14 : vector<16x1xf32>
    %16 = arith.addf %9, %15 : vector<16x1xf32>
    %17 = arith.mulf %7, %0 : vector<16x32xf32>
    %cst_6 = arith.constant dense<0.000000e+00> : vector<16xf32>
    %18 = vector.multi_reduction <add>, %17, %cst_6 [1] : vector<16x32xf32> to vector<16xf32>
    %19 = vector.shape_cast %18 : vector<16xf32> to vector<16x1xf32>
    %20 = arith.subf %16, %19 : vector<16x1xf32>
    %21 = arith.subf %19, %16 : vector<16x1xf32>
    %22 = math.exp %21 : vector<16x1xf32>
    %cst_7 = arith.constant 1.000000e+00 : f32
    %23 = vector.broadcast %cst_7 : f32 to vector<16x1xf32>
    %24 = arith.subf %23, %22 : vector<16x1xf32>
    %25 = arith.mulf %24, %24 : vector<16x1xf32>
    %26 = arith.mulf %25, %25 : vector<16x1xf32>
    %27 = arith.mulf %24, %26 : vector<16x1xf32>
    %28 = arith.mulf %2, %27 : vector<16x1xf32>
    %29 = arith.mulf %28, %20 : vector<16x1xf32>
    %30 = tpu.iota {dimensions = array<i32: 0>} : vector<16x1xi32>
    %c16_i32 = arith.constant 16 : i32
    %31 = arith.muli %arg0, %c16_i32 : i32
    %32 = vector.broadcast %31 : i32 to vector<16x1xi32>
    %33 = arith.addi %32, %30 : vector<16x1xi32>
    %c40_i32 = arith.constant 40 : i32
    %34 = vector.broadcast %c40_i32 : i32 to vector<16x1xi32>
    %35 = arith.cmpi slt, %33, %34 : vector<16x1xi32>
    %cst_8 = arith.constant 0.000000e+00 : f32
    %36 = vector.broadcast %cst_8 : f32 to vector<16x1xf32>
    %37 = arith.select %35, %20, %36 : vector<16x1xi1>, vector<16x1xf32>
    %cst_9 = arith.constant 0.000000e+00 : f32
    %38 = vector.broadcast %cst_9 : f32 to vector<16x1xf32>
    %39 = arith.select %35, %29, %38 : vector<16x1xi1>, vector<16x1xf32>
    %c0_10 = arith.constant 0 : index
    %c0_11 = arith.constant 0 : index
    %40 = vector.load %arg5[%c0_10, %c0_11] : memref<16x1xf32, #tpu.memory_space<vmem>>, vector<16x1xf32>
    tpu.vector_store %arg5[%c0_10, %c0_11], %37 {strides = array<i32>} : memref<16x1xf32, #tpu.memory_space<vmem>>, vector<16x1xf32>,
    %41 = vector.shape_cast %39 : vector<16x1xf32> to vector<1x16x1xf32>
    %cst_12 = arith.constant dense<0.000000e+00> : vector<1xf32>
    %42 = vector.multi_reduction <add>, %41, %cst_12 [1, 2] : vector<1x16x1xf32> to vector<1xf32>
    %43 = vector.shape_cast %42 : vector<1xf32> to vector<1x1x1xf32>
    %44 = vector.extract %43[0, 0, 0] : f32 from vector<1x1x1xf32>
    %45 = vector.broadcast %44 : f32 to vector<1x8x128xf32>
    %c0_13 = arith.constant 0 : index
    %c0_14 = arith.constant 0 : index
    %c0_15 = arith.constant 0 : index
    %46 = vector.load %arg4[%c0_13, %c0_14, %c0_15] : memref<1x8x128xf32, #tpu.memory_space<vmem>>, vector<1x8x128xf32>
    tpu.vector_store %arg4[%c0_13, %c0_14, %c0_15], %45 {strides = array<i32>} : memref<1x8x128xf32, #tpu.memory_space<vmem>>, vector<1x8x128xf32>,
    return
  }
  func.func @transform_0(%arg0: i32) -> (i32, i32) {
    %c0_i32 = arith.constant 0 : i32
    %c0_i32_0 = arith.constant 0 : i32
    return %arg0, %c0_i32 : i32, i32
  }
  func.func @transform_1(%arg0: i32) -> (i32, i32) {
    %c0_i32 = arith.constant 0 : i32
    %c0_i32_0 = arith.constant 0 : i32
    return %arg0, %c0_i32 : i32, i32
  }
  func.func @transform_2(%arg0: i32) -> (i32, i32) {
    %c0_i32 = arith.constant 0 : i32
    %c0_i32_0 = arith.constant 0 : i32
    return %arg0, %c0_i32 : i32, i32
  }
  func.func @transform_3(%arg0: i32) -> (i32, i32, i32) {
    %c0_i32 = arith.constant 0 : i32
    %c0_i32_0 = arith.constant 0 : i32
    %c0_i32_1 = arith.constant 0 : i32
    return %arg0, %c0_i32, %c0_i32_0 : i32, i32, i32
  }
  func.func @transform_4(%arg0: i32) -> (i32, i32) {
    %c0_i32 = arith.constant 0 : i32
    %c0_i32_0 = arith.constant 0 : i32
    return %arg0, %c0_i32 : i32, i32
  }
}

</mosaic_0001>

<llo_original>
// kernel: tpu_custom_call.1
$region0: #{tpu_custom_call.1}
  #allocation0 [shape = 'u32[]', space=smem, size = 0x4, offset = 0x4, fixed_abs, tag = 'smem constant byte address 0x4 - core index']
  #allocation1 [shape = 'u32[144,128]{1,0:T(1,128)}', space=vmem, size = 0x12000, scoped, tag = 'internal scratch']
  %s0 = inlined_call_operand.vmem [shape: f32[40,32], index: 0, kind: input, shape index: {}]
  %s1 = inlined_call_operand.vmem [shape: s32[40,1], index: 1, kind: input, shape index: {}]
  %s2 = inlined_call_operand.vmem [shape: f32[40,1], index: 2, kind: input, shape index: {}]
  %s3 = inlined_call_operand.hbm [shape: f32[3,8,128], index: 3, kind: output, shape index: {0}]
  %s4 = inlined_call_operand.vmem [shape: f32[40,1], index: 4, kind: output, shape index: {1}]
  %5 = xla_tuple %s3, %s4
  %s6 = sld [smem:[#allocation0]]
  $region101: #{tpu_custom_call.1} parent=0
    _
  %s8 = ssub.s32 1, %s6
  %s9 = scalar_select 0, %s8, %s6
  $region1: #{tpu_custom_call.1} parent=0
    #allocation2 [shape = 'u8[8192]{0}', space=vmem, size = 0x2000, scoped, tag = 'output window, operand 0']
    #allocation3 [shape = 's32[2]{0}', space=sflag, size = 0x8, scoped, tag = 'scoped memory for tpu_custom_call.1']
    #allocation4 [shape = 'u8[16384]{0}', space=vmem, size = 0x4000, scoped, tag = 'output window, operand 1']
    %10 = vsyncpa [#allocation3], 0
    %s11 = scalar_lea.sflag [#allocation3], 1
    %12 = vsyncpa %s11, 0
    loop: start=0, step=1, limit=5
    $region2: #{tpu_custom_call.1} parent=1 // loop_pre_header
      _
    $region3: #{tpu_custom_call.1} parent=1 // loop_header
      %s14 = sphi 0, %s18
      %p15 = scmp.ge.s32.totalorder %s14, 5
      %s24 = sphi 0, %s26
      %s27 = sphi 0, %s24
      %s28 = sphi 0, %s27
      %s44 = sphi 0, %s28
      %s50 = sphi 0, %s52
      %s53 = sphi 0, %s50
      %s54 = sphi 0, %s53
      %s70 = sphi 0, %s54
      %s76 = sphi 0, %s78
      %s79 = sphi 0, %s76
      %s80 = sphi 0, %s79
      %s96 = sphi 0, %s80
      %s102 = sphi 0, %s104
      %s105 = sphi 0, %s102
      %s106 = sphi 0, %s105
      %s122 = sphi 0, %s106
      %s128 = sphi 0, %s130
      %s131 = sphi 0, %s128
      %s132 = sphi 0, %s131
      %s148 = sphi 0, %s132
    $region4: #{tpu_custom_call.1} parent=1 // loop_header_branch
      %17 = sbr.rel (%p15) target = $region8
    $region5: #{tpu_custom_call.1} parent=1 // loop_body
      %s19 = ssub.s32 %s14, 1
      %s20 = ssub.s32 %s14, 2
      %s21 = sadd.s32 %s14, 1
      %s22 = ssub.s32 %s14, %s21
      %p23 = scmp.eq.s32.totalorder %s22, 0
      %s25 = sadd.s32 %s24, 1
      %s26 = scalar_select %p23, %s24, %s25
      %p29 = pneg %p23
      %p30 = scmp.eq.s32.totalorder %s14, 2
      %p31 = por %p29, %p30
      %p32 = scmp.ne.s32.totalorder %s24, %s27
      %p33 = scmp.eq.s32.totalorder %s14, 0
      %p34 = por %p32, %p33
      %p35 = scmp.ne.s32.totalorder %s24, %s27
      %p36 = scmp.eq.s32.totalorder %s19, 2
      %p37 = por %p35, %p36
      %p38 = scmp.ne.s32.totalorder %s27, %s28
      %p39 = scmp.eq.s32.totalorder %s19, 0
      %p40 = por %p38, %p39
      %p41 = scmp.ne.s32.totalorder %s27, %s28
      %p42 = scmp.eq.s32.totalorder %s20, 2
      %p43 = por %p41, %p42
      %p45 = scmp.ne.s32.totalorder %s28, %s44
      %p46 = scmp.eq.s32.totalorder %s20, 0
      %p47 = por %p45, %p46
      %s48 = ssub.s32 %s14, %s21
      %p49 = scmp.eq.s32.totalorder %s48, 0
      %s51 = sadd.s32 %s50, 1
      %s52 = scalar_select %p49, %s50, %s51
      %p55 = pneg %p49
      %p56 = scmp.eq.s32.totalorder %s14, 2
      %p57 = por %p55, %p56
      %p58 = scmp.ne.s32.totalorder %s50, %s53
      %p59 = scmp.eq.s32.totalorder %s14, 0
      %p60 = por %p58, %p59
      %p61 = scmp.ne.s32.totalorder %s50, %s53
      %p62 = scmp.eq.s32.totalorder %s19, 2
      %p63 = por %p61, %p62
      %p64 = scmp.ne.s32.totalorder %s53, %s54
      %p65 = scmp.eq.s32.totalorder %s19, 0
      %p66 = por %p64, %p65
      %p67 = scmp.ne.s32.totalorder %s53, %s54
      %p68 = scmp.eq.s32.totalorder %s20, 2
      %p69 = por %p67, %p68
      %p71 = scmp.ne.s32.totalorder %s54, %s70
      %p72 = scmp.eq.s32.totalorder %s20, 0
      %p73 = por %p71, %p72
      %s74 = ssub.s32 %s14, %s21
      %p75 = scmp.eq.s32.totalorder %s74, 0
      %s77 = sadd.s32 %s76, 1
      %s78 = scalar_select %p75, %s76, %s77
      %p81 = pneg %p75
      %p82 = scmp.eq.s32.totalorder %s14, 2
      %p83 = por %p81, %p82
      %p84 = scmp.ne.s32.totalorder %s76, %s79
      %p85 = scmp.eq.s32.totalorder %s14, 0
      %p86 = por %p84, %p85
      %p87 = scmp.ne.s32.totalorder %s76, %s79
      %p88 = scmp.eq.s32.totalorder %s19, 2
      %p89 = por %p87, %p88
      %p90 = scmp.ne.s32.totalorder %s79, %s80
      %p91 = scmp.eq.s32.totalorder %s19, 0
      %p92 = por %p90, %p91
      %p93 = scmp.ne.s32.totalorder %s79, %s80
      %p94 = scmp.eq.s32.totalorder %s20, 2
      %p95 = por %p93, %p94
      %p97 = scmp.ne.s32.totalorder %s80, %s96
      %p98 = scmp.eq.s32.totalorder %s20, 0
      %p99 = por %p97, %p98
      %s100 = ssub.s32 %s14, %s21
      %p101 = scmp.eq.s32.totalorder %s100, 0
      %s103 = sadd.s32 %s102, 1
      %s104 = scalar_select %p101, %s102, %s103
      %p107 = pneg %p101
      %p108 = scmp.eq.s32.totalorder %s14, 2
      %p109 = por %p107, %p108
      %p110 = scmp.ne.s32.totalorder %s102, %s105
      %p111 = scmp.eq.s32.totalorder %s14, 0
      %p112 = por %p110, %p111
      %p113 = scmp.ne.s32.totalorder %s102, %s105
      %p114 = scmp.eq.s32.totalorder %s19, 2
      %p115 = por %p113, %p114
      %p116 = scmp.ne.s32.totalorder %s105, %s106
      %p117 = scmp.eq.s32.totalorder %s19, 0
      %p118 = por %p116, %p117
      %p119 = scmp.ne.s32.totalorder %s105, %s106
      %p120 = scmp.eq.s32.totalorder %s20, 2
      %p121 = por %p119, %p120
      %p123 = scmp.ne.s32.totalorder %s106, %s122
      %p124 = scmp.eq.s32.totalorder %s20, 0
      %p125 = por %p123, %p124
      %s126 = ssub.s32 %s14, %s21
      %p127 = scmp.eq.s32.totalorder %s126, 0
      %s129 = sadd.s32 %s128, 1
      %s130 = scalar_select %p127, %s128, %s129
      %p133 = pneg %p127
      %p134 = scmp.eq.s32.totalorder %s14, 2
      %p135 = por %p133, %p134
      %p136 = scmp.ne.s32.totalorder %s128, %s131
      %p137 = scmp.eq.s32.totalorder %s14, 0
      %p138 = por %p136, %p137
      %p139 = scmp.ne.s32.totalorder %s128, %s131
      %p140 = scmp.eq.s32.totalorder %s19, 2
      %p141 = por %p139, %p140
      %p142 = scmp.ne.s32.totalorder %s131, %s132
      %p143 = scmp.eq.s32.totalorder %s19, 0
      %p144 = por %p142, %p143
      %p145 = scmp.ne.s32.totalorder %s131, %s132
      %p146 = scmp.eq.s32.totalorder %s20, 2
      %p147 = por %p145, %p146
      %p149 = scmp.ne.s32.totalorder %s132, %s148
      %p150 = scmp.eq.s32.totalorder %s20, 0
      %p151 = por %p149, %p150
      %p152 = scmp.le.s32.totalorder 1, %s14
      %p153 = scmp.lt.s32.totalorder %s14, 4
      %p154 = pnand %p152, %p153
      %p155 = pneg %p154
      // Predicated region
      $region9: #{tpu_custom_call.1} parent=5 // pred_check
        _
      $region10: #{tpu_custom_call.1} parent=5 // pred_check_branch
        %157 = sbr.rel (%p154) target = $region12
      $region11: #{tpu_custom_call.1} parent=5 // pred_region
        %s158 = ssub.s32 %s14, 1
      $region12: #{tpu_custom_call.1} parent=5 // pred_fallthru
        _
      %p159 = scmp.lt.s32.totalorder %s14, 3
      // Predicated region
      $region13: #{tpu_custom_call.1} parent=5 // pred_check
        %p160 = pneg %p159
      $region14: #{tpu_custom_call.1} parent=5 // pred_check_branch
        %162 = sbr.rel (%p160) target = $region16
      $region15: #{tpu_custom_call.1} parent=5 // pred_region
        // Predicated region
        $region17: #{tpu_custom_call.1} parent=15 // pred_check
          %p163 = pneg %p34
        $region18: #{tpu_custom_call.1} parent=15 // pred_check_branch
          %165 = sbr.rel (%p163) target = $region20
        $region19: #{tpu_custom_call.1} parent=15 // pred_region
          %s166 = smul.u32 2, %s14
          %s167 = ssub.s32 5, %s166
          %p168 = scmp.lt.s32.totalorder %s167, 2
          %s169 = scalar_select %p168, %s167, 2
          %s170 = smul.u32 128, %s169
          %p171 = scmp.lt.s32.totalorder %s166, 4
          %s172 = scalar_select %p171, %s166, 4
          %s173 = smul.addr %s172, 8
          %s174 = scalar_lea.vmem %s0, %s173
          %s175 = smul.u32 2, %s14
          %s176 = ssub.s32 5, %s175
          %p177 = scmp.lt.s32.totalorder %s176, 2
          %s178 = scalar_select %p177, %s176, 2
          %s179 = smul.u32 128, %s178
        $region20: #{tpu_custom_call.1} parent=15 // pred_fallthru
          _
        // Predicated region
        $region21: #{tpu_custom_call.1} parent=15 // pred_check
          %p180 = pneg %p60
        $region22: #{tpu_custom_call.1} parent=15 // pred_check_branch
          %182 = sbr.rel (%p180) target = $region24
        $region23: #{tpu_custom_call.1} parent=15 // pred_region
          %s183 = smul.u32 2, %s14
          %s184 = ssub.s32 5, %s183
          %p185 = scmp.lt.s32.totalorder %s184, 2
          %s186 = scalar_select %p185, %s184, 2
          %s187 = smul.u32 128, %s186
          %p188 = scmp.lt.s32.totalorder %s183, 4
          %s189 = scalar_select %p188, %s183, 4
          %s190 = smul.addr %s189, 8
          %s191 = scalar_lea.vmem %s1, %s190
          %s192 = smul.u32 2, %s14
          %s193 = ssub.s32 5, %s192
          %p194 = scmp.lt.s32.totalorder %s193, 2
          %s195 = scalar_select %p194, %s193, 2
          %s196 = smul.u32 128, %s195
        $region24: #{tpu_custom_call.1} parent=15 // pred_fallthru
          _
        // Predicated region
        $region25: #{tpu_custom_call.1} parent=15 // pred_check
          %p197 = pneg %p86
        $region26: #{tpu_custom_call.1} parent=15 // pred_check_branch
          %199 = sbr.rel (%p197) target = $region28
        $region27: #{tpu_custom_call.1} parent=15 // pred_region
          %s200 = smul.u32 2, %s14
          %s201 = ssub.s32 5, %s200
          %p202 = scmp.lt.s32.totalorder %s201, 2
          %s203 = scalar_select %p202, %s201, 2
          %s204 = smul.u32 128, %s203
          %p205 = scmp.lt.s32.totalorder %s200, 4
          %s206 = scalar_select %p205, %s200, 4
          %s207 = smul.addr %s206, 8
          %s208 = scalar_lea.vmem %s2, %s207
          %s209 = smul.u32 2, %s14
          %s210 = ssub.s32 5, %s209
          %p211 = scmp.lt.s32.totalorder %s210, 2
          %s212 = scalar_select %p211, %s210, 2
          %s213 = smul.u32 128, %s212
        $region28: #{tpu_custom_call.1} parent=15 // pred_fallthru
          _
      $region16: #{tpu_custom_call.1} parent=5 // pred_fallthru
        _
      %p214 = scmp.le.s32.totalorder 1, %s14
      %p215 = scmp.lt.s32.totalorder %s14, 4
      %p216 = pnand %p214, %p215
      %p217 = pneg %p216
      // Predicated region
      $region29: #{tpu_custom_call.1} parent=5 // pred_check
        _
      $region30: #{tpu_custom_call.1} parent=5 // pred_check_branch
        %219 = sbr.rel (%p216) target = $region32
      $region31: #{tpu_custom_call.1} parent=5 // pred_region
        %s220 = ssub.s32 %s14, 1
        %s221 = smul.u32 2, %s19
        %s222 = ssub.s32 5, %s221
        %p223 = scmp.lt.s32.totalorder %s222, 2
        %s224 = scalar_select %p223, %s222, 2
        %s225 = smul.u32 128, %s224
        %p226 = scmp.lt.s32.totalorder %s221, 4
        %s227 = scalar_select %p226, %s221, 4
        %s228 = smul.addr %s227, 8
        %s229 = scalar_lea.vmem %s0, %s228
        %p230 = pneg %p40
        %p231 = pneg %p37
        %s232 = smul.u32 2, %s19
        %s233 = ssub.s32 5, %s232
        %p234 = scmp.lt.s32.totalorder %s233, 2
        %s235 = scalar_select %p234, %s233, 2
        %s236 = smul.u32 128, %s235
        %p237 = scmp.lt.s32.totalorder %s232, 4
        %s238 = scalar_select %p237, %s232, 4
        %s239 = smul.addr %s238, 8
        %s240 = scalar_lea.vmem %s1, %s239
        %p241 = pneg %p66
        %p242 = pneg %p63
        %s243 = smul.u32 2, %s19
        %s244 = ssub.s32 5, %s243
        %p245 = scmp.lt.s32.totalorder %s244, 2
        %s246 = scalar_select %p245, %s244, 2
        %s247 = smul.u32 128, %s246
        %p248 = scmp.lt.s32.totalorder %s243, 4
        %s249 = scalar_select %p248, %s243, 4
        %s250 = smul.addr %s249, 8
        %s251 = scalar_lea.vmem %s2, %s250
        %p252 = pneg %p92
        %p253 = pneg %p89
        %p254 = pneg %p118
        %p255 = pneg %p115
        %s256 = sand.u32 %s105, 1
        %s257 = scalar_lea.sflag [#allocation3], %s256
        %s258 = sand.u32 %s105, 1
        %s259 = smul.addr %s258, 8
        %s260 = scalar_lea.vmem [#allocation2], %s259
        %p261 = pneg %p144
        %p262 = pneg %p141
        %s263 = sand.u32 %s131, 1
        %s264 = sand.u32 %s131, 1
        %s265 = smul.addr %s264, 16
        %s266 = scalar_lea.vmem [#allocation4], %s265
        %s267 = smul.u32 2, %s19
        %s268 = ssub.s32 5, %s267
        %p269 = scmp.lt.s32.totalorder %s268, 2
        %s270 = scalar_select %p269, %s268, 2
        %s271 = smul.u32 128, %s270
        %p272 = scmp.lt.s32.totalorder %s267, 4
        %s273 = scalar_select %p272, %s267, 4
        %s274 = smul.addr %s273, 8
        %s275 = scalar_lea.vmem %s0, %s274
        %s276 = smul.u32 2, %s19
        %s277 = ssub.s32 5, %s276
        %p278 = scmp.lt.s32.totalorder %s277, 2
        %s279 = scalar_select %p278, %s277, 2
        %s280 = smul.u32 128, %s279
        %s281 = smul.u32 2, %s19
        %s282 = ssub.s32 5, %s281
        %p283 = scmp.lt.s32.totalorder %s282, 2
        %s284 = scalar_select %p283, %s282, 2
        %s285 = smul.u32 128, %s284
        %p286 = scmp.lt.s32.totalorder %s281, 4
        %s287 = scalar_select %p286, %s281, 4
        %s288 = smul.addr %s287, 8
        %s289 = scalar_lea.vmem %s1, %s288
        %s290 = smul.u32 2, %s19
        %s291 = ssub.s32 5, %s290
        %p292 = scmp.lt.s32.totalorder %s291, 2
        %s293 = scalar_select %p292, %s291, 2
        %s294 = smul.u32 128, %s293
        %s295 = smul.u32 2, %s19
        %s296 = ssub.s32 5, %s295
        %p297 = scmp.lt.s32.totalorder %s296, 2
        %s298 = scalar_select %p297, %s296, 2
        %s299 = smul.u32 128, %s298
        %p300 = scmp.lt.s32.totalorder %s295, 4
        %s301 = scalar_select %p300, %s295, 4
        %s302 = smul.addr %s301, 8
        %s303 = scalar_lea.vmem %s2, %s302
        %s304 = smul.u32 2, %s19
        %s305 = ssub.s32 5, %s304
        %p306 = scmp.lt.s32.totalorder %s305, 2
        %s307 = scalar_select %p306, %s305, 2
        %s308 = smul.u32 128, %s307
        %s309 = smul.u32 2, %s19
        %s310 = ssub.s32 5, %s309
        %p311 = scmp.lt.s32.totalorder %s310, 2
        %s312 = scalar_select %p311, %s310, 2
        %s313 = smul.u32 128, %s312
        %v314 = vld [vmem:[%s275] sm:$0xff]
        %v315 = vld [vmem:[%s275 + $0x8] sm:$0xff]
        %v316 = vld [vmem:[%s289] sm:$0xff]
        %v317 = vld [vmem:[%s289 + $0x8] sm:$0xff]
        %v318 = vld [vmem:[%s303] sm:$0xff]
        %v319 = vld [vmem:[%s303 + $0x8] sm:$0xff]
        %v320 = vlaneseq
        %v321 = vand.u32 %v320, 127
        %322 = vset.pattern.permute.xlu0 0
        %323 = vperm.xlu0 %322, %v316
        %v324 = vpop.permute.xlu0 %323
        %325 = vset.pattern.permute.xlu0 0
        %326 = vperm.xlu0 %325, %v317
        %v327 = vpop.permute.xlu0 %326
        %vm328 = vcmp.eq.s32.totalorder %v321, %v324
        %vm329 = vcmp.eq.s32.totalorder %v321, %v327
        %v330 = vsel %vm328, 1, 0
        %v331 = vsel %vm329, 1, 0
        %v332 = vcvt.s32.f32 %v330
        %v333 = vcvt.s32.f32 %v331
        %vm334 = vcmask 261120
        %v335 = vsel %vm334, %v314, -inf
        %336 = vmax.xlane.f32.xlu0 %v335
        %v337 = vpop.xlane.xlu0 %336
        %v338 = vsel %vm334, %v315, -inf
        %339 = vmax.xlane.f32.xlu0 %v338
        %v340 = vpop.xlane.xlu0 %339
        %v341 = vsub.f32 %v314, %v337
        %v342 = vsub.f32 %v315, %v340
        %v343 = vmul.f32 %v341, 1.442695
        %v344 = vpow.pop %v343
        %v345 = vmul.f32 %v342, 1.442695
        %v346 = vpow.pop %v345
        %v347 = vsel %vm334, %v344, 0.0
        %348 = vadd.xlane.f32.xlu0 %v347
        %v349 = vpop.xlane.xlu0 %348
        %v350 = vsel %vm334, %v346, 0.0
        %351 = vadd.xlane.f32.xlu0 %v350
        %v352 = vpop.xlane.xlu0 %351
        %v353 = vlog2.pop %v349
        %v354 = vmul.f32 %v353, 0.6931472
        %v355 = vlog2.pop %v352
        %v356 = vmul.f32 %v355, 0.6931472
        %v357 = vadd.f32 %v337, %v354
        %v358 = vadd.f32 %v340, %v356
        %v359 = vmul.f32 %v332, %v314
        %v360 = vmul.f32 %v333, %v315
        %v361 = vsel %vm334, %v359, 0.0
        %362 = vadd.xlane.f32.xlu0 %v361
        %v363 = vpop.xlane.xlu0 %362
        %v364 = vsel %vm334, %v360, 0.0
        %365 = vadd.xlane.f32.xlu0 %v364
        %v366 = vpop.xlane.xlu0 %365
        %v367 = vsub.f32 %v357, %v363
        %v368 = vsub.f32 %v358, %v366
        %v369 = vsub.f32 %v363, %v357
        %v370 = vsub.f32 %v366, %v358
        %v371 = vmul.f32 %v369, 1.442695
        %v372 = vpow.pop %v371
        %v373 = vmul.f32 %v370, 1.442695
        %v374 = vpow.pop %v373
        %v375 = vsub.f32 1.0, %v372
        %v376 = vsub.f32 1.0, %v374
        %v377 = vmul.f32 %v375, %v375
        %v378 = vmul.f32 %v376, %v376
        %v379 = vmul.f32 %v377, %v377
        %v380 = vmul.f32 %v378, %v378
        %v381 = vmul.f32 %v375, %v379
        %v382 = vmul.f32 %v376, %v380
        %v383 = vmul.f32 %v318, %v381
        %v384 = vmul.f32 %v319, %v382
        %v385 = vmul.f32 %v383, %v367
        %v386 = vmul.f32 %v384, %v368
        %v387 = vlaneseq
        %v388 = vshrl.u32 %v387, 7
        %v389 = vadd.s32 %v388, 8
        %s390 = smul.u32 %s19, 16
        %v391 = vstv %s390
        %v392 = vadd.s32 %v391, %v388
        %v393 = vadd.s32 %v391, %v389
        %vm394 = vcmp.lt.s32.totalorder %v392, 40
        %vm395 = vcmp.lt.s32.totalorder %v393, 40
        %v396 = vsel %vm394, %v367, 0.0
        %v397 = vsel %vm395, %v368, 0.0
        %v398 = vsel %vm394, %v385, 0.0
        %v399 = vsel %vm395, %v386, 0.0
        %vm400 = vcmask 7168
        %401 = vst.msk [vmem:[%s266] sm:$0xff] %vm400, %v396
        %402 = vst.msk [vmem:[%s266 + $0x8] sm:$0xff] %vm400, %v397
        %v403 = vsel %vm400, %v398, 0.0
        %v404 = vsel %vm400, %v399, 0.0
        %v405 = vadd.f32 %v403, %v404
        %406 = vadd.xlane.f32.xlu0 %v405
        %v407 = vpop.xlane.xlu0 %406
        %v408 = vrot.slane %v407, 4
        %v409 = vadd.f32 %v407, %v408
        %v410 = vrot.slane %v409, 2
        %v411 = vadd.f32 %v409, %v410
        %v412 = vrot.slane %v411, 1
        %v413 = vadd.f32 %v411, %v412
        %s414 = vtos %v413
        %v415 = vstv %s414
        %416 = vst [vmem:[%s260] sm:$0xff] %v415
        %s417 = sand.u32 %s105, 1
        %s418 = scalar_lea.sflag [#allocation3], %s417
        %s419 = sand.u32 %s105, 1
        %s420 = smul.addr %s419, 8
        %s421 = scalar_lea.vmem [#allocation2], %s420
        %s422 = sand.u32 %s131, 1
        %s423 = sand.u32 %s131, 1
        %s424 = smul.addr %s423, 16
        %s425 = scalar_lea.vmem [#allocation4], %s424
        // Predicated region
        $region33: #{tpu_custom_call.1} parent=31 // pred_check
          %p426 = pneg %p115
        $region34: #{tpu_custom_call.1} parent=31 // pred_check_branch
          %428 = sbr.rel (%p426) target = $region36
        $region35: #{tpu_custom_call.1} parent=31 // pred_region
          %s430 = ssub.s32 128, 128
          %431 = vsyncadd %s418, %s430
          %s432 = smul.addr %s19, 128
          %s433 = scalar_lea.hbm %s3, %s432
          %s435 = sshll.u32 %s421, 4
          %s436 = int_to_ptr.vmem [resolvable:$true] %s435
          %438 = dma.vmem_to_hbm [thread:$0]  %s436, 128, %s433, %s418
        $region36: #{tpu_custom_call.1} parent=31 // pred_fallthru
          _
        // Predicated region
        $region37: #{tpu_custom_call.1} parent=31 // pred_check
          %p439 = pneg %p141
        $region38: #{tpu_custom_call.1} parent=31 // pred_check_branch
          %441 = sbr.rel (%p439) target = $region40
        $region39: #{tpu_custom_call.1} parent=31 // pred_region
          %s442 = smul.u32 2, %s19
          %s443 = ssub.s32 5, %s442
          %p444 = scmp.lt.s32.totalorder %s443, 2
          %s445 = scalar_select %p444, %s443, 2
          %s446 = smul.u32 128, %s445
          %p447 = scmp.ne.s32.totalorder 0, %s446
          %s448 = smul.addr %s442, 8
          %s449 = scalar_lea.vmem %s4, %s448
          // Predicated region
          $region41: #{tpu_custom_call.1} parent=39 // pred_check
            %p450 = pneg %p447
          $region42: #{tpu_custom_call.1} parent=39 // pred_check_branch
            %452 = sbr.rel (%p450) target = $region44
          $region43: #{tpu_custom_call.1} parent=39 // pred_region
            // Predicated region
            $region45: #{tpu_custom_call.1} parent=43 // pred_check
              _
            $region46: #{tpu_custom_call.1} parent=43 // pred_check_branch
              %454 = sbr.rel (0) target = $region48
            $region47: #{tpu_custom_call.1} parent=43 // pred_region
              // Predicated region
              $region67: #{tpu_custom_call.1} parent=47 // pred_check
                _
              $region68: #{tpu_custom_call.1} parent=47 // pred_check_branch
                %505 = sbr.rel (0) target = $region70
              $region69: #{tpu_custom_call.1} parent=47 // pred_region
                %s506 = sshrl.u32 %s445, 1
                // While loop
                $region71: #{tpu_custom_call.1} parent=69 // loop_pre_header
                  _
                $region72: #{tpu_custom_call.1} parent=69 // loop_header
                  %s508 = sphi 0, %s510
                  %p509 = scmp.ge.s32.totalorder %s508, %s506
                  %s513 = sphi 0, %s522
                  %s514 = sphi %s425, %s525
                  %s515 = sphi %s449, %s526
                $region73: #{tpu_custom_call.1} parent=69 // loop_header_branch
                  %512 = sbr.rel (%p509) target = $region77
                $region74: #{tpu_custom_call.1} parent=69 // loop_body
                  %v516 = vld [vmem:[%s514] sm:$0xff]
                  %517 = vst [vmem:[%s515] sm:$0xff] %v516
                  %v518 = vld [vmem:[%s514 + $0x8] sm:$0xff]
                  %519 = vst [vmem:[%s515 + $0x8] sm:$0xff] %v518
                  %s520 = sadd.s32 1, %s513
                  %p521 = scmp.ge.s32.totalorder %s520, %s506
                  %s522 = scalar_select %p521, 0, %s520
                  %s523 = smul.u32 %s522, 16
                  %s524 = smul.u32 %s522, 16
                  %s525 = scalar_lea.vmem %s425, %s523 [#allocation4]
                  %s526 = scalar_lea.vmem %s449, %s524
                $region75: #{tpu_custom_call.1} parent=69 // loop_footer
                  %s510 = sadd.s32 %s508, 1
                $region76: #{tpu_custom_call.1} parent=69 // loop_footer_branch
                  %507 = sbr.rel target = $region72
                $region77: #{tpu_custom_call.1} parent=69 // loop_exit
                  _
                %s527 = sshrl.u32 %s445, 1
                %s528 = sand.u32 %s445, 1
                %s529 = smul.u32 %s527, 2
                %s530 = smul.u32 8, %s529
                %s531 = scalar_lea.vmem %s425, %s530 [#allocation4]
                %s532 = smul.u32 8, %s529
                %s533 = scalar_lea.vmem %s449, %s532
                // While loop
                $region78: #{tpu_custom_call.1} parent=69 // loop_pre_header
                  _
                $region79: #{tpu_custom_call.1} parent=69 // loop_header
                  %s535 = sphi 0, %s537
                  %p536 = scmp.ge.s32.totalorder %s535, %s528
                  %s540 = sphi 0, %s547
                  %s541 = sphi %s531, %s550
                  %s542 = sphi %s533, %s551
                $region80: #{tpu_custom_call.1} parent=69 // loop_header_branch
                  %539 = sbr.rel (%p536) target = $region84
                $region81: #{tpu_custom_call.1} parent=69 // loop_body
                  %v543 = vld [vmem:[%s541] sm:$0xff]
                  %544 = vst [vmem:[%s542] sm:$0xff] %v543
                  %s545 = sadd.s32 1, %s540
                  %p546 = scmp.ge.s32.totalorder %s545, %s528
                  %s547 = scalar_select %p546, 0, %s545
                  %s548 = smul.u32 %s547, 8
                  %s549 = smul.u32 %s547, 8
                  %s550 = scalar_lea.vmem %s531, %s548 [#allocation4]
                  %s551 = scalar_lea.vmem %s533, %s549
                $region82: #{tpu_custom_call.1} parent=69 // loop_footer
                  %s537 = sadd.s32 %s535, 1
                $region83: #{tpu_custom_call.1} parent=69 // loop_footer_branch
                  %534 = sbr.rel target = $region79
                $region84: #{tpu_custom_call.1} parent=69 // loop_exit
                  _
              $region70: #{tpu_custom_call.1} parent=47 // pred_fallthru
                _
              // Predicated region
              $region85: #{tpu_custom_call.1} parent=47 // pred_check
                _
              $region86: #{tpu_custom_call.1} parent=47 // pred_check_branch
                %553 = sbr.rel target = $region88
              $region87: #{tpu_custom_call.1} parent=47 // pred_region
                _
              $region88: #{tpu_custom_call.1} parent=47 // pred_fallthru
                _
            $region48: #{tpu_custom_call.1} parent=43 // pred_fallthru
              _
            // Predicated region
            $region49: #{tpu_custom_call.1} parent=43 // pred_check
              _
            $region50: #{tpu_custom_call.1} parent=43 // pred_check_branch
              %456 = sbr.rel target = $region52
            $region51: #{tpu_custom_call.1} parent=43 // pred_region
              %s458 = sshrl.u32 %s445, 1
              // While loop
              $region53: #{tpu_custom_call.1} parent=51 // loop_pre_header
                _
              $region54: #{tpu_custom_call.1} parent=51 // loop_header
                %s460 = sphi 0, %s462
                %p461 = scmp.ge.s32.totalorder %s460, %s458
                %s465 = sphi 0, %s474
                %s466 = sphi %s425, %s477
                %s467 = sphi %s449, %s478
              $region55: #{tpu_custom_call.1} parent=51 // loop_header_branch
                %464 = sbr.rel (%p461) target = $region59
              $region56: #{tpu_custom_call.1} parent=51 // loop_body
                %v468 = vld [vmem:[%s466] sm:$0xff]
                %469 = vst [vmem:[%s467] sm:$0xff] %v468
                %v470 = vld [vmem:[%s466 + $0x8] sm:$0xff]
                %471 = vst [vmem:[%s467 + $0x8] sm:$0xff] %v470
                %s472 = sadd.s32 1, %s465
                %p473 = scmp.ge.s32.totalorder %s472, %s458
                %s474 = scalar_select %p473, 0, %s472
                %s475 = smul.u32 %s474, 16
                %s476 = smul.u32 %s474, 16
                %s477 = scalar_lea.vmem %s425, %s475 [#allocation4]
                %s478 = scalar_lea.vmem %s449, %s476
              $region57: #{tpu_custom_call.1} parent=51 // loop_footer
                %s462 = sadd.s32 %s460, 1
              $region58: #{tpu_custom_call.1} parent=51 // loop_footer_branch
                %459 = sbr.rel target = $region54
              $region59: #{tpu_custom_call.1} parent=51 // loop_exit
                _
              %s479 = sshrl.u32 %s445, 1
              %s480 = sand.u32 %s445, 1
              %s481 = smul.u32 %s479, 2
              %s482 = smul.u32 8, %s481
              %s483 = scalar_lea.vmem %s425, %s482 [#allocation4]
              %s484 = smul.u32 8, %s481
              %s485 = scalar_lea.vmem %s449, %s484
              // While loop
              $region60: #{tpu_custom_call.1} parent=51 // loop_pre_header
                _
              $region61: #{tpu_custom_call.1} parent=51 // loop_header
                %s487 = sphi 0, %s489
                %p488 = scmp.ge.s32.totalorder %s487, %s480
                %s492 = sphi 0, %s499
                %s493 = sphi %s483, %s502
                %s494 = sphi %s485, %s503
              $region62: #{tpu_custom_call.1} parent=51 // loop_header_branch
                %491 = sbr.rel (%p488) target = $region66
              $region63: #{tpu_custom_call.1} parent=51 // loop_body
                %v495 = vld [vmem:[%s493] sm:$0xff]
                %496 = vst [vmem:[%s494] sm:$0xff] %v495
                %s497 = sadd.s32 1, %s492
                %p498 = scmp.ge.s32.totalorder %s497, %s480
                %s499 = scalar_select %p498, 0, %s497
                %s500 = smul.u32 %s499, 8
                %s501 = smul.u32 %s499, 8
                %s502 = scalar_lea.vmem %s483, %s500 [#allocation4]
                %s503 = scalar_lea.vmem %s485, %s501
              $region64: #{tpu_custom_call.1} parent=51 // loop_footer
                %s489 = sadd.s32 %s487, 1
              $region65: #{tpu_custom_call.1} parent=51 // loop_footer_branch
                %486 = sbr.rel target = $region61
              $region66: #{tpu_custom_call.1} parent=51 // loop_exit
                _
            $region52: #{tpu_custom_call.1} parent=43 // pred_fallthru
              _
          $region44: #{tpu_custom_call.1} parent=39 // pred_fallthru
            _
          %554 = vnop
        $region40: #{tpu_custom_call.1} parent=31 // pred_fallthru
          _
      $region32: #{tpu_custom_call.1} parent=5 // pred_fallthru
        _
      %p555 = scmp.le.s32.totalorder 2, %s14
      // Predicated region
      $region89: #{tpu_custom_call.1} parent=5 // pred_check
        %p556 = pneg %p555
      $region90: #{tpu_custom_call.1} parent=5 // pred_check_branch
        %558 = sbr.rel (%p556) target = $region92
      $region91: #{tpu_custom_call.1} parent=5 // pred_region
        %s559 = ssub.s32 %s14, 2
        // Predicated region
        $region93: #{tpu_custom_call.1} parent=91 // pred_check
          %p560 = pneg %p121
        $region94: #{tpu_custom_call.1} parent=91 // pred_check_branch
          %562 = sbr.rel (%p560) target = $region96
        $region95: #{tpu_custom_call.1} parent=91 // pred_region
          %s563 = sand.u32 %s106, 1
          %s564 = scalar_lea.sflag [#allocation3], %s563
          %s565 = sand.u32 %s106, 1
          %s566 = smul.addr %s565, 8
          %s567 = scalar_lea.vmem [#allocation2], %s566
          %568 = dma.done %s564, 128
        $region96: #{tpu_custom_call.1} parent=91 // pred_fallthru
          _
        // Predicated region
        $region97: #{tpu_custom_call.1} parent=91 // pred_check
          %p569 = pneg %p147
        $region98: #{tpu_custom_call.1} parent=91 // pred_check_branch
          %571 = sbr.rel (%p569) target = $region100
        $region99: #{tpu_custom_call.1} parent=91 // pred_region
          %s572 = sand.u32 %s132, 1
          %s573 = sand.u32 %s132, 1
          %s574 = smul.addr %s573, 16
          %s575 = scalar_lea.vmem [#allocation4], %s574
        $region100: #{tpu_custom_call.1} parent=91 // pred_fallthru
          _
      $region92: #{tpu_custom_call.1} parent=5 // pred_fallthru
        _
    $region6: #{tpu_custom_call.1} parent=1 // loop_footer
      %s18 = sadd.s32 1, %s14
    $region7: #{tpu_custom_call.1} parent=1 // loop_footer_branch
      %13 = sbr.rel target = $region3
    $region8: #{tpu_custom_call.1} parent=1 // loop_exit
      _
    %576 = vsyncpa [#allocation3], 1
    %s577 = scalar_lea.sflag [#allocation3], 1
    %578 = vsyncpa %s577, 1

</llo_original>
